<compile_context>
chip_gen: v7x
topology: tpu7x:2x2x1
jax: 0.10.0
libtpu: 0.0.40
codegen_flags: <defaults>
</compile_context>

<pallas_src>
import functools

import jax
import jax.numpy as jnp
from jax import lax
from jax.experimental import pallas as pl
from jax.experimental.pallas import tpu as pltpu

_VMEM_LIMIT_BYTES = 48 * 1024 * 1024
_TARGET_TILE_BYTES = 4 * 1024 * 1024


# --------------------------------------------------------------------------
# helpers
# --------------------------------------------------------------------------

def _has_multiple_tensorcores():
    """True only on chips that expose >1 TensorCore per device (megacore)."""
    try:
        kind = jax.devices()[0].device_kind.lower()
    except Exception:
        return True  # conservative: allow the grid split
    return any(tag in kind for tag in ("v7", "v4", "v5p"))


def _choose_batch_block(B, bytes_per_batch_elem, *, split_for_megacore=False):
    """Largest batch chunk with ~_TARGET_TILE_BYTES per VMEM buffer."""
    b_blk = max(1, min(B, _TARGET_TILE_BYTES // max(bytes_per_batch_elem, 1)))
    if split_for_megacore and B >= 2:
        # >= 2 grid steps so the "parallel" batch axis can use both cores.
        b_blk = min(b_blk, -(-B // 2))
    return int(b_blk)


def _sample_mask_bounds(key, n_masks, mask_param, axis_size):
    """torchaudio mask_along_axis bounds: flat int32 [s0, e0, s1, e1, ...]."""
    if n_masks == 0:
        return jnp.zeros((2,), dtype=jnp.int32)  # dummy, never read
    k1, k2 = jax.random.split(key)
    u1 = jax.random.uniform(k1, (n_masks,))
    u2 = jax.random.uniform(k2, (n_masks,))
    value = u1 * float(mask_param)
    min_value = u2 * (float(axis_size) - value)
    start = jnp.floor(min_value).astype(jnp.int32)
    # torchaudio: mask_end = min_value.long() + value.long()
    end = start + jnp.floor(value).astype(jnp.int32)
    return jnp.stack([start, end], axis=-1).reshape(-1).astype(jnp.int32)


def sample_specaugment_bounds(key, n_mels, time_steps, *, freq_masks, freq_width,
                              time_masks, time_width_ratio):
    time_width = int(time_steps * time_width_ratio)
    k_f, k_t = jax.random.split(key)
    fb = _sample_mask_bounds(k_f, freq_masks, freq_width, n_mels)
    tb = _sample_mask_bounds(k_t, time_masks, time_width, time_steps)
    return fb, tb, time_width


# --------------------------------------------------------------------------
# path 1: streaming kernel (read + write everything once)
# --------------------------------------------------------------------------

def _specaugment_stream_kernel(fb_ref, tb_ref, x_ref, o_ref, *, freq_masks,
                               time_masks):
    # x_ref / o_ref: (b_blk, F, T) VMEM tile; fb_ref / tb_ref: int32 SMEM.
    x = x_ref[...]
    _, F, T = x.shape

    # Small (F,1)/(1,T) index vectors instead of full (F,T) int32 iotas.
    # Rebuilt every grid step on purpose: an init-once scratch would be
    # uninitialized on the second core under megacore "parallel" semantics.
    f_idx = lax.broadcasted_iota(jnp.int32, (F, 1), 0)
    t_idx = lax.broadcasted_iota(jnp.int32, (1, T), 1)

    f_masked = jnp.zeros((F, 1), dtype=jnp.bool_)
    for m in range(freq_masks):          # static -> unrolled at trace time
        s = fb_ref[2 * m]
        e = fb_ref[2 * m + 1]
        f_masked = f_masked | ((f_idx >= s) & (f_idx < e))

    t_masked = jnp.zeros((1, T), dtype=jnp.bool_)
    for m in range(time_masks):
        s = tb_ref[2 * m]
        e = tb_ref[2 * m + 1]
        t_masked = t_masked | ((t_idx >= s) & (t_idx < e))

    masked = f_masked | t_masked                       # (F, T) via broadcast
    zero = jnp.zeros((), x.dtype)                      # scalar, no big const
    o_ref[...] = jnp.where(masked[None, :, :], zero, x)


def _apply_stream(x, freq_bounds, time_bounds, freq_masks, time_masks):
    B, F, T = x.shape
    b_blk = _choose_batch_block(B, F * T * x.dtype.itemsize,
                                split_for_megacore=_has_multiple_tensorcores())
    kernel = functools.partial(_specaugment_stream_kernel,
                               freq_masks=freq_masks, time_masks=time_masks)
    return pl.pallas_call(
        kernel,
        out_shape=jax.ShapeDtypeStruct((B, F, T), x.dtype),
        grid=(pl.cdiv(B, b_blk),),
        in_specs=[
            pl.BlockSpec(memory_space=pltpu.MemorySpace.SMEM),
            pl.BlockSpec(memory_space=pltpu.MemorySpace.SMEM),
            # Last two block dims equal the full array dims -> (8,128) rule ok.
            pl.BlockSpec((b_blk, F, T), lambda b: (b, 0, 0)),
        ],
        out_specs=pl.BlockSpec((b_blk, F, T), lambda b: (b, 0, 0)),
        compiler_params=pltpu.CompilerParams(
            dimension_semantics=("parallel",),
            vmem_limit_bytes=_VMEM_LIMIT_BYTES),
    )(freq_bounds, time_bounds, x)


# --------------------------------------------------------------------------
# path 2: in-place stripe kernel (touch only the masked stripes)
# --------------------------------------------------------------------------

def _specaugment_inplace_kernel(fb_ref, tb_ref, x_any, o_any, fbuf, tbuf, sem,
                                *, freq_masks, time_masks, b_blk, B, F, T,
                                wf, wt):
    # x_any / o_any are the SAME HBM buffer (input_output_aliases); all
    # reads and writes go through o_any.
    del x_any
    b0 = pl.program_id(0) * b_blk
    # Clamp the tail chunk; overlapping RMW of zero-stripes is idempotent.
    b0 = jnp.maximum(0, jnp.minimum(b0, B - b_blk))
    zero = jnp.zeros((), o_any.dtype)

    if freq_masks > 0:
        f_idx = lax.broadcasted_iota(jnp.int32, (wf, 1), 0)
        for m in range(freq_masks):
            s = fb_ref[2 * m]
            e = fb_ref[2 * m + 1]
            sd = jnp.maximum(0, jnp.minimum(s, F - wf))   # stripe window start
            stripe = o_any.at[pl.ds(b0, b_blk), pl.ds(sd, wf), :]
            cp = pltpu.make_async_copy(stripe, fbuf, sem)
            cp.start(); cp.wait()
            r = f_idx + sd
            hit = (r >= s) & (r < e)                       # (wf, 1)
            fbuf[...] = jnp.where(hit[None, :, :], zero, fbuf[...])
            cp = pltpu.make_async_copy(fbuf, stripe, sem)
            cp.start(); cp.wait()

    if time_masks > 0:
        t_idx = lax.broadcasted_iota(jnp.int32, (1, wt), 1)
        for m in range(time_masks):
            s = tb_ref[2 * m]
            e = tb_ref[2 * m + 1]
            sd = jnp.maximum(0, jnp.minimum(s, T - wt))
            stripe = o_any.at[pl.ds(b0, b_blk), :, pl.ds(sd, wt)]
            cp = pltpu.make_async_copy(stripe, tbuf, sem)
            cp.start(); cp.wait()
            c = t_idx + sd
            hit = (c >= s) & (c < e)                       # (1, wt)
            tbuf[...] = jnp.where(hit[None, :, :], zero, tbuf[...])
            cp = pltpu.make_async_copy(tbuf, stripe, sem)
            cp.start(); cp.wait()


def _apply_inplace(x, freq_bounds, time_bounds, freq_masks, time_masks,
                   freq_width, time_width):
    B, F, T = x.shape
    wf = int(min(max(freq_width, 0), F))   # static max stripe widths
    wt = int(min(max(time_width, 0), T))
    do_freq = freq_masks > 0 and wf > 0
    do_time = time_masks > 0 and wt > 0
    if not (do_freq or do_time):
        return x

    itemsize = x.dtype.itemsize
    per_b = max(wf * T if do_freq else 0, F * wt if do_time else 0) * itemsize
    b_blk = _choose_batch_block(B, per_b)

    kernel = functools.partial(
        _specaugment_inplace_kernel,
        freq_masks=freq_masks if do_freq else 0,
        time_masks=time_masks if do_time else 0,
        b_blk=b_blk, B=B, F=F, T=T, wf=max(wf, 1), wt=max(wt, 1))

    return pl.pallas_call(
        kernel,
        out_shape=jax.ShapeDtypeStruct((B, F, T), x.dtype),
        grid=(pl.cdiv(B, b_blk),),
        in_specs=[
            pl.BlockSpec(memory_space=pltpu.MemorySpace.SMEM),
            pl.BlockSpec(memory_space=pltpu.MemorySpace.SMEM),
            pl.BlockSpec(memory_space=pl.ANY),             # x stays in HBM
        ],
        out_specs=pl.BlockSpec(memory_space=pl.ANY),
        scratch_shapes=[
            pltpu.VMEM((b_blk, max(wf, 1), T), x.dtype),   # freq row stripe
            pltpu.VMEM((b_blk, F, max(wt, 1)), x.dtype),   # time col stripe
            pltpu.SemaphoreType.DMA(()),
        ],
        # Operand index counts all args passed below: (fb, tb, x) -> x is 2.
        input_output_aliases={2: 0},
        compiler_params=pltpu.CompilerParams(
            dimension_semantics=("arbitrary",),
            vmem_limit_bytes=_VMEM_LIMIT_BYTES),
    )(freq_bounds, time_bounds, x)


# --------------------------------------------------------------------------
# public API (mirrors the PyTorch module's forward)
# --------------------------------------------------------------------------

def apply_specaugment(x, freq_bounds, time_bounds, *, freq_masks, time_masks,
                      freq_width, time_width, inplace=False):
    if freq_masks == 0 and time_masks == 0:
        return x
    if inplace:
        return _apply_inplace(x, freq_bounds, time_bounds, freq_masks,
                              time_masks, freq_width, time_width)
    return _apply_stream(x, freq_bounds, time_bounds, freq_masks, time_masks)


def spec_augment(x, key, *, freq_masks, freq_width, time_masks,
                 time_width_ratio, inplace=False):
    """SpecAugment forward: x of shape (batch, n_mels, time_steps)."""
    _, F, T = x.shape
    fb, tb, time_width = sample_specaugment_bounds(
        key, F, T, freq_masks=freq_masks, freq_width=freq_width,
        time_masks=time_masks, time_width_ratio=time_width_ratio)
    return apply_specaugment(x, fb, tb, freq_masks=freq_masks,
                             time_masks=time_masks, freq_width=freq_width,
                             time_width=time_width, inplace=inplace)


# --------------------------------------------------------------------------
# pure-JAX reference
# --------------------------------------------------------------------------

def spec_augment_ref(x, freq_bounds, time_bounds, freq_masks, time_masks):
    _, F, T = x.shape
    f_idx = jnp.arange(F)[None, :, None]
    t_idx = jnp.arange(T)[None, None, :]
    masked = jnp.zeros((1, F, T), dtype=jnp.bool_)
    for m in range(freq_masks):
        masked = masked | ((f_idx >= freq_bounds[2 * m])
                           & (f_idx < freq_bounds[2 * m + 1]))
    for m in range(time_masks):
        masked = masked | ((t_idx >= time_bounds[2 * m])
                           & (t_idx < time_bounds[2 * m + 1]))
    return jnp.where(masked, jnp.zeros((), x.dtype), x)


# --------------------------------------------------------------------------
# demo / self-check
# --------------------------------------------------------------------------

if __name__ == "__main__":
    FREQ_MASKS = 2
    FREQ_WIDTH = 10
    TIME_MASKS = 2
    TIME_WIDTH_RATIO = 0.1

    key = jax.random.PRNGKey(0)
    k_x, k_aug = jax.random.split(key)

    # (batch, n_mels, time_steps); T multiple of 128 -> lane-dense stores.
    B, F, T = 4, 80, 256
    x = jax.random.normal(k_x, (B, F, T), dtype=jnp.float32)

    # Reference with the identical bounds the wrapper will draw from k_aug.
    fb, tb, _ = sample_specaugment_bounds(
        k_aug, F, T, freq_masks=FREQ_MASKS, freq_width=FREQ_WIDTH,
        time_masks=TIME_MASKS, time_width_ratio=TIME_WIDTH_RATIO)
    ref = spec_augment_ref(x, fb, tb, FREQ_MASKS, TIME_MASKS)

    # Streaming path.
    out_stream = jax.block_until_ready(spec_augment(
        x, k_aug, freq_masks=FREQ_MASKS, freq_width=FREQ_WIDTH,
        time_masks=TIME_MASKS, time_width_ratio=TIME_WIDTH_RATIO,
        inplace=False))
    assert out_stream.shape == x.shape and out_stream.dtype == x.dtype
    assert jnp.array_equal(out_stream, ref), "streaming kernel mismatch"

    # In-place stripe path (aliased output, stripe-only HBM traffic).
    out_inplace = jax.block_until_ready(spec_augment(
        x, k_aug, freq_masks=FREQ_MASKS, freq_width=FREQ_WIDTH,
        time_masks=TIME_MASKS, time_width_ratio=TIME_WIDTH_RATIO,
        inplace=True))
    assert out_inplace.shape == x.shape and out_inplace.dtype == x.dtype
    assert jnp.array_equal(out_inplace, ref), "in-place stripe kernel mismatch"

    print("KERNEL_OK")
</pallas_src>

<mosaic_0001>
module attributes {stable_mosaic.version = 11 : i64} {
  func.func @_specaugment_stream_kernel(%arg0: i32, %arg1: memref<4xi32, #tpu.memory_space<smem>>, %arg2: memref<4xi32, #tpu.memory_space<smem>>, %arg3: memref<4x80x256xf32, #tpu.memory_space<vmem>>, %arg4: memref<4x80x256xf32, #tpu.memory_space<vmem>>) attributes {dimension_semantics = [#tpu.dimension_semantics<parallel>], iteration_bounds = array<i64: 1>, scalar_prefetch = 0 : i64, scratch_operands = 0 : i64, tpu.core_type = #tpu.core_type<tc>, window_params = [{transform_indices = @transform_0, window_bounds = array<i64: 4>}, {transform_indices = @transform_1, window_bounds = array<i64: 4>}, {transform_indices = @transform_2, window_bounds = array<i64: 4, 80, 256>}, {transform_indices = @transform_3, window_bounds = array<i64: 4, 80, 256>}]} {
    %c0 = arith.constant 0 : index
    %c0_0 = arith.constant 0 : index
    %c0_1 = arith.constant 0 : index
    %0 = vector.load %arg3[%c0, %c0_0, %c0_1] : memref<4x80x256xf32, #tpu.memory_space<vmem>>, vector<4x80x256xf32>
    %1 = tpu.iota {dimensions = array<i32: 0>} : vector<80x1xi32>
    %2 = tpu.iota {dimensions = array<i32: 1>} : vector<1x256xi32>
    %false = arith.constant false
    %3 = vector.broadcast %false : i1 to vector<80x1xi1>
    %c0_2 = arith.constant 0 : index
    %4 = memref.load %arg1[%c0_2] : memref<4xi32, #tpu.memory_space<smem>>
    %c1 = arith.constant 1 : index
    %5 = memref.load %arg1[%c1] : memref<4xi32, #tpu.memory_space<smem>>
    %6 = vector.broadcast %4 : i32 to vector<80x1xi32>
    %7 = arith.cmpi sge, %1, %6 : vector<80x1xi32>
    %8 = vector.broadcast %5 : i32 to vector<80x1xi32>
    %9 = arith.cmpi slt, %1, %8 : vector<80x1xi32>
    %10 = arith.andi %7, %9 : vector<80x1xi1>
    %11 = arith.ori %3, %10 : vector<80x1xi1>
    %c2 = arith.constant 2 : index
    %12 = memref.load %arg1[%c2] : memref<4xi32, #tpu.memory_space<smem>>
    %c3 = arith.constant 3 : index
    %13 = memref.load %arg1[%c3] : memref<4xi32, #tpu.memory_space<smem>>
    %14 = vector.broadcast %12 : i32 to vector<80x1xi32>
    %15 = arith.cmpi sge, %1, %14 : vector<80x1xi32>
    %16 = vector.broadcast %13 : i32 to vector<80x1xi32>
    %17 = arith.cmpi slt, %1, %16 : vector<80x1xi32>
    %18 = arith.andi %15, %17 : vector<80x1xi1>
    %19 = arith.ori %11, %18 : vector<80x1xi1>
    %false_3 = arith.constant false
    %20 = vector.broadcast %false_3 : i1 to vector<1x256xi1>
    %c0_4 = arith.constant 0 : index
    %21 = memref.load %arg2[%c0_4] : memref<4xi32, #tpu.memory_space<smem>>
    %c1_5 = arith.constant 1 : index
    %22 = memref.load %arg2[%c1_5] : memref<4xi32, #tpu.memory_space<smem>>
    %23 = vector.broadcast %21 : i32 to vector<1x256xi32>
    %24 = arith.cmpi sge, %2, %23 : vector<1x256xi32>
    %25 = vector.broadcast %22 : i32 to vector<1x256xi32>
    %26 = arith.cmpi slt, %2, %25 : vector<1x256xi32>
    %27 = arith.andi %24, %26 : vector<1x256xi1>
    %28 = arith.ori %20, %27 : vector<1x256xi1>
    %c2_6 = arith.constant 2 : index
    %29 = memref.load %arg2[%c2_6] : memref<4xi32, #tpu.memory_space<smem>>
    %c3_7 = arith.constant 3 : index
    %30 = memref.load %arg2[%c3_7] : memref<4xi32, #tpu.memory_space<smem>>
    %31 = vector.broadcast %29 : i32 to vector<1x256xi32>
    %32 = arith.cmpi sge, %2, %31 : vector<1x256xi32>
    %33 = vector.broadcast %30 : i32 to vector<1x256xi32>
    %34 = arith.cmpi slt, %2, %33 : vector<1x256xi32>
    %35 = arith.andi %32, %34 : vector<1x256xi1>
    %36 = arith.ori %28, %35 : vector<1x256xi1>
    %37 = vector.broadcast %19 : vector<80x1xi1> to vector<80x256xi1>
    %38 = vector.broadcast %36 : vector<1x256xi1> to vector<80x256xi1>
    %39 = arith.ori %37, %38 : vector<80x256xi1>
    %40 = vector.shape_cast %39 : vector<80x256xi1> to vector<1x80x256xi1>
    %cst = arith.constant 0.000000e+00 : f32
    %41 = vector.shape_cast %40 : vector<1x80x256xi1> to vector<1x80x256xi1>
    %42 = vector.broadcast %41 : vector<1x80x256xi1> to vector<4x80x256xi1>
    %43 = vector.broadcast %cst : f32 to vector<4x80x256xf32>
    %44 = arith.select %42, %43, %0 : vector<4x80x256xi1>, vector<4x80x256xf32>
    %c0_8 = arith.constant 0 : index
    %c0_9 = arith.constant 0 : index
    %c0_10 = arith.constant 0 : index
    %45 = vector.load %arg4[%c0_8, %c0_9, %c0_10] : memref<4x80x256xf32, #tpu.memory_space<vmem>>, vector<4x80x256xf32>
    tpu.vector_store %arg4[%c0_8, %c0_9, %c0_10], %44 {strides = array<i32>} : memref<4x80x256xf32, #tpu.memory_space<vmem>>, vector<4x80x256xf32>,
    return
  }
  func.func @transform_0(%arg0: i32) -> i32 {
    %c0_i32 = arith.constant 0 : i32
    %c0_i32_0 = arith.constant 0 : i32
    return %c0_i32 : i32
  }
  func.func @transform_1(%arg0: i32) -> i32 {
    %c0_i32 = arith.constant 0 : i32
    %c0_i32_0 = arith.constant 0 : i32
    return %c0_i32 : i32
  }
  func.func @transform_2(%arg0: i32) -> (i32, i32, i32) {
    %c0_i32 = arith.constant 0 : i32
    %c0_i32_0 = arith.constant 0 : i32
    %c0_i32_1 = arith.constant 0 : i32
    return %arg0, %c0_i32, %c0_i32_0 : i32, i32, i32
  }
  func.func @transform_3(%arg0: i32) -> (i32, i32, i32) {
    %c0_i32 = arith.constant 0 : i32
    %c0_i32_0 = arith.constant 0 : i32
    %c0_i32_1 = arith.constant 0 : i32
    return %arg0, %c0_i32, %c0_i32_0 : i32, i32, i32
  }
}

</mosaic_0001>

<llo_original>
// kernel: tpu_custom_call.1
$region0: #{tpu_custom_call.1}
  #allocation0 [shape = 'u32[]', space=smem, size = 0x4, offset = 0x4, fixed_abs, tag = 'smem constant byte address 0x4 - core index']
  #allocation1 [shape = 'u32[144,128]{1,0:T(1,128)}', space=vmem, size = 0x12000, scoped, tag = 'internal scratch']
  %s0 = inlined_call_operand.hbm [shape: s32[4], index: 0, kind: input, shape index: {}]
  %s1 = inlined_call_operand.vmem [shape: s32[4], index: 1, kind: input, shape index: {}]
  %s2 = inlined_call_operand.hbm [shape: f32[4,80,256], index: 2, kind: input, shape index: {}]
  %s3 = inlined_call_operand.hbm [shape: f32[4,80,256], index: 3, kind: output, shape index: {}]
  %s4 = sld [smem:[#allocation0]]
  $region34: #{tpu_custom_call.1} parent=0
    _
  %s6 = ssub.s32 1, %s4
  %s7 = scalar_select 0, %s6, %s4
  $region1: #{tpu_custom_call.1} parent=0
    #allocation2 [shape = 'u8[512]{0}', space=smem, size = 0x200, scoped, tag = 'input window, operand 0, single buffered']
    #allocation3 [shape = 's32[1]{0}', space=sflag, size = 0x4, scoped, tag = 'scoped memory for tpu_custom_call.1']
    #allocation4 [shape = 's32[1]{0}', space=sflag, size = 0x4, scoped, tag = 'scoped memory for tpu_custom_call.1']
    #allocation5 [shape = 's32[1]{0}', space=sflag, size = 0x4, scoped, tag = 'scoped memory for tpu_custom_call.1']
    #allocation6 [shape = 's32[1]{0}', space=sflag, size = 0x4, scoped, tag = 'scoped memory for tpu_custom_call.1']
    #allocation7 [shape = 'u8[512]{0}', space=smem, size = 0x200, scoped, tag = 'input window, operand 1, single buffered']
    #allocation8 [shape = 'u8[327680]{0}', space=vmem, size = 0x50000, scoped, tag = 'input window, operand 2, single buffered']
    #allocation9 [shape = 'u8[327680]{0}', space=vmem, size = 0x50000, scoped, tag = 'output window, operand 0, single buffered']
    %8 = vsyncpa [#allocation5], 0
    %9 = vsyncpa [#allocation6], 0
    %10 = vsyncpa [#allocation3], 0
    %11 = vsyncpa [#allocation4], 0
    // Predicated region
    $region2: #{tpu_custom_call.1} parent=1 // pred_check
      _
    $region3: #{tpu_custom_call.1} parent=1 // pred_check_branch
      %13 = sbr.rel (0) target = $region5
    $region4: #{tpu_custom_call.1} parent=1 // pred_region
      %s15 = ssub.s32 16, 16
      %16 = vsyncadd [#allocation5], %s15
      %19 = dma.hbm_to_smem %s0, 16, [#allocation2], [#allocation5]
    $region5: #{tpu_custom_call.1} parent=1 // pred_fallthru
      _
    // Predicated region
    $region6: #{tpu_custom_call.1} parent=1 // pred_check
      _
    $region7: #{tpu_custom_call.1} parent=1 // pred_check_branch
      %21 = sbr.rel (0) target = $region9
    $region8: #{tpu_custom_call.1} parent=1 // pred_region
      %s23 = ssub.s32 16, 16
      %24 = vsyncadd [#allocation6], %s23
      %s26 = sshll.u32 %s1, 4
      %s27 = int_to_ptr.vmem [resolvable:$true] %s26
      %29 = dma.vmem_to_smem %s27, 16, [#allocation7], [#allocation6]
    $region9: #{tpu_custom_call.1} parent=1 // pred_fallthru
      _
    // Predicated region
    $region10: #{tpu_custom_call.1} parent=1 // pred_check
      _
    $region11: #{tpu_custom_call.1} parent=1 // pred_check_branch
      %31 = sbr.rel (0) target = $region13
    $region12: #{tpu_custom_call.1} parent=1 // pred_region
      %s33 = ssub.s32 10240, 10240
      %34 = vsyncadd [#allocation3], %s33
      %s35 = sshll.u32 [#allocation8], 4
      %s36 = int_to_ptr.vmem [resolvable:$true] %s35
      %41 = dma.hbm_to_vmem [thread:$0]  %s2, 10240, %s36, [#allocation3], 256, 256, 16
    $region13: #{tpu_custom_call.1} parent=1 // pred_fallthru
      _
    // Predicated region
    $region14: #{tpu_custom_call.1} parent=1 // pred_check
      _
    $region15: #{tpu_custom_call.1} parent=1 // pred_check_branch
      %43 = sbr.rel (0) target = $region17
    $region16: #{tpu_custom_call.1} parent=1 // pred_region
      %44 = dma.done [#allocation5], 16
    $region17: #{tpu_custom_call.1} parent=1 // pred_fallthru
      _
    // Predicated region
    $region18: #{tpu_custom_call.1} parent=1 // pred_check
      _
    $region19: #{tpu_custom_call.1} parent=1 // pred_check_branch
      %46 = sbr.rel (0) target = $region21
    $region20: #{tpu_custom_call.1} parent=1 // pred_region
      %47 = dma.done [#allocation6], 16
    $region21: #{tpu_custom_call.1} parent=1 // pred_fallthru
      _
    // Predicated region
    $region22: #{tpu_custom_call.1} parent=1 // pred_check
      _
    $region23: #{tpu_custom_call.1} parent=1 // pred_check_branch
      %49 = sbr.rel (0) target = $region25
    $region24: #{tpu_custom_call.1} parent=1 // pred_region
      %50 = dma.done [#allocation3], 10240
    $region25: #{tpu_custom_call.1} parent=1 // pred_fallthru
      _
    %51 = sfence
    %v52 = vld [vmem:[#allocation8] sm:$0xff]
    %v53 = vld [vmem:[#allocation8 + $0x8] sm:$0xff]
    %v54 = vld [vmem:[#allocation8 + $0x10] sm:$0xff]
    %v55 = vld [vmem:[#allocation8 + $0x18] sm:$0xff]
    %v56 = vld [vmem:[#allocation8 + $0x20] sm:$0xff]
    %v57 = vld [vmem:[#allocation8 + $0x28] sm:$0xff]
    %v58 = vld [vmem:[#allocation8 + $0x30] sm:$0xff]
    %v59 = vld [vmem:[#allocation8 + $0x38] sm:$0xff]
    %v60 = vld [vmem:[#allocation8 + $0x40] sm:$0xff]
    %v61 = vld [vmem:[#allocation8 + $0x48] sm:$0xff]
    %v62 = vld [vmem:[#allocation8 + $0x50] sm:$0xff]
    %v63 = vld [vmem:[#allocation8 + $0x58] sm:$0xff]
    %v64 = vld [vmem:[#allocation8 + $0x60] sm:$0xff]
    %v65 = vld [vmem:[#allocation8 + $0x68] sm:$0xff]
    %v66 = vld [vmem:[#allocation8 + $0x70] sm:$0xff]
    %v67 = vld [vmem:[#allocation8 + $0x78] sm:$0xff]
    %v68 = vld [vmem:[#allocation8 + $0x80] sm:$0xff]
    %v69 = vld [vmem:[#allocation8 + $0x88] sm:$0xff]
    %v70 = vld [vmem:[#allocation8 + $0x90] sm:$0xff]
    %v71 = vld [vmem:[#allocation8 + $0x98] sm:$0xff]
    %v72 = vld [vmem:[#allocation8 + $0xa0] sm:$0xff]
    %v73 = vld [vmem:[#allocation8 + $0xa8] sm:$0xff]
    %v74 = vld [vmem:[#allocation8 + $0xb0] sm:$0xff]
    %v75 = vld [vmem:[#allocation8 + $0xb8] sm:$0xff]
    %v76 = vld [vmem:[#allocation8 + $0xc0] sm:$0xff]
    %v77 = vld [vmem:[#allocation8 + $0xc8] sm:$0xff]
    %v78 = vld [vmem:[#allocation8 + $0xd0] sm:$0xff]
    %v79 = vld [vmem:[#allocation8 + $0xd8] sm:$0xff]
    %v80 = vld [vmem:[#allocation8 + $0xe0] sm:$0xff]
    %v81 = vld [vmem:[#allocation8 + $0xe8] sm:$0xff]
    %v82 = vld [vmem:[#allocation8 + $0xf0] sm:$0xff]
    %v83 = vld [vmem:[#allocation8 + $0xf8] sm:$0xff]
    %v84 = vld [vmem:[#allocation8 + $0x100] sm:$0xff]
    %v85 = vld [vmem:[#allocation8 + $0x108] sm:$0xff]
    %v86 = vld [vmem:[#allocation8 + $0x110] sm:$0xff]
    %v87 = vld [vmem:[#allocation8 + $0x118] sm:$0xff]
    %v88 = vld [vmem:[#allocation8 + $0x120] sm:$0xff]
    %v89 = vld [vmem:[#allocation8 + $0x128] sm:$0xff]
    %v90 = vld [vmem:[#allocation8 + $0x130] sm:$0xff]
    %v91 = vld [vmem:[#allocation8 + $0x138] sm:$0xff]
    %v92 = vld [vmem:[#allocation8 + $0x140] sm:$0xff]
    %v93 = vld [vmem:[#allocation8 + $0x148] sm:$0xff]
    %v94 = vld [vmem:[#allocation8 + $0x150] sm:$0xff]
    %v95 = vld [vmem:[#allocation8 + $0x158] sm:$0xff]
    %v96 = vld [vmem:[#allocation8 + $0x160] sm:$0xff]
    %v97 = vld [vmem:[#allocation8 + $0x168] sm:$0xff]
    %v98 = vld [vmem:[#allocation8 + $0x170] sm:$0xff]
    %v99 = vld [vmem:[#allocation8 + $0x178] sm:$0xff]
    %v100 = vld [vmem:[#allocation8 + $0x180] sm:$0xff]
    %v101 = vld [vmem:[#allocation8 + $0x188] sm:$0xff]
    %v102 = vld [vmem:[#allocation8 + $0x190] sm:$0xff]
    %v103 = vld [vmem:[#allocation8 + $0x198] sm:$0xff]
    %v104 = vld [vmem:[#allocation8 + $0x1a0] sm:$0xff]
    %v105 = vld [vmem:[#allocation8 + $0x1a8] sm:$0xff]
    %v106 = vld [vmem:[#allocation8 + $0x1b0] sm:$0xff]
    %v107 = vld [vmem:[#allocation8 + $0x1b8] sm:$0xff]
    %v108 = vld [vmem:[#allocation8 + $0x1c0] sm:$0xff]
    %v109 = vld [vmem:[#allocation8 + $0x1c8] sm:$0xff]
    %v110 = vld [vmem:[#allocation8 + $0x1d0] sm:$0xff]
    %v111 = vld [vmem:[#allocation8 + $0x1d8] sm:$0xff]
    %v112 = vld [vmem:[#allocation8 + $0x1e0] sm:$0xff]
    %v113 = vld [vmem:[#allocation8 + $0x1e8] sm:$0xff]
    %v114 = vld [vmem:[#allocation8 + $0x1f0] sm:$0xff]
    %v115 = vld [vmem:[#allocation8 + $0x1f8] sm:$0xff]
    %v116 = vld [vmem:[#allocation8 + $0x200] sm:$0xff]
    %v117 = vld [vmem:[#allocation8 + $0x208] sm:$0xff]
    %v118 = vld [vmem:[#allocation8 + $0x210] sm:$0xff]
    %v119 = vld [vmem:[#allocation8 + $0x218] sm:$0xff]
    %v120 = vld [vmem:[#allocation8 + $0x220] sm:$0xff]
    %v121 = vld [vmem:[#allocation8 + $0x228] sm:$0xff]
    %v122 = vld [vmem:[#allocation8 + $0x230] sm:$0xff]
    %v123 = vld [vmem:[#allocation8 + $0x238] sm:$0xff]
    %v124 = vld [vmem:[#allocation8 + $0x240] sm:$0xff]
    %v125 = vld [vmem:[#allocation8 + $0x248] sm:$0xff]
    %v126 = vld [vmem:[#allocation8 + $0x250] sm:$0xff]
    %v127 = vld [vmem:[#allocation8 + $0x258] sm:$0xff]
    %v128 = vld [vmem:[#allocation8 + $0x260] sm:$0xff]
    %v129 = vld [vmem:[#allocation8 + $0x268] sm:$0xff]
    %v130 = vld [vmem:[#allocation8 + $0x270] sm:$0xff]
    %v131 = vld [vmem:[#allocation8 + $0x278] sm:$0xff]
    %v132 = vlaneseq
    %v133 = vshrl.u32 %v132, 7
    %v134 = vadd.s32 %v133, 8
    %v135 = vadd.s32 %v133, 16
    %v136 = vadd.s32 %v133, 24
    %v137 = vadd.s32 %v133, 32
    %v138 = vadd.s32 %v133, 40
    %v139 = vadd.s32 %v133, 48
    %v140 = vadd.s32 %v133, 56
    %v141 = vadd.s32 %v133, 64
    %v142 = vadd.s32 %v133, 72
    %v143 = vlaneseq
    %v144 = vand.u32 %v143, 127
    %v145 = vadd.s32 %v144, 128
    %s146 = sld [smem:[#allocation2]]
    %s147 = sld [smem:[#allocation2 + $0x1]]
    %v148 = vstv %s146
    %vm149 = vcmp.ge.s32.totalorder %v133, %v148
    %vm150 = vcmp.ge.s32.totalorder %v134, %v148
    %vm151 = vcmp.ge.s32.totalorder %v135, %v148
    %vm152 = vcmp.ge.s32.totalorder %v136, %v148
    %vm153 = vcmp.ge.s32.totalorder %v137, %v148
    %vm154 = vcmp.ge.s32.totalorder %v138, %v148
    %vm155 = vcmp.ge.s32.totalorder %v139, %v148
    %vm156 = vcmp.ge.s32.totalorder %v140, %v148
    %vm157 = vcmp.ge.s32.totalorder %v141, %v148
    %vm158 = vcmp.ge.s32.totalorder %v142, %v148
    %v159 = vstv %s147
    %vm160 = vcmp.lt.s32.totalorder %v133, %v159
    %vm161 = vcmp.lt.s32.totalorder %v134, %v159
    %vm162 = vcmp.lt.s32.totalorder %v135, %v159
    %vm163 = vcmp.lt.s32.totalorder %v136, %v159
    %vm164 = vcmp.lt.s32.totalorder %v137, %v159
    %vm165 = vcmp.lt.s32.totalorder %v138, %v159
    %vm166 = vcmp.lt.s32.totalorder %v139, %v159
    %vm167 = vcmp.lt.s32.totalorder %v140, %v159
    %vm168 = vcmp.lt.s32.totalorder %v141, %v159
    %vm169 = vcmp.lt.s32.totalorder %v142, %v159
    %vm170 = vmand %vm149, %vm160
    %vm171 = vmand %vm150, %vm161
    %vm172 = vmand %vm151, %vm162
    %vm173 = vmand %vm152, %vm163
    %vm174 = vmand %vm153, %vm164
    %vm175 = vmand %vm154, %vm165
    %vm176 = vmand %vm155, %vm166
    %vm177 = vmand %vm156, %vm167
    %vm178 = vmand %vm157, %vm168
    %vm179 = vmand %vm158, %vm169
    %s180 = sld [smem:[#allocation2 + $0x2]]
    %s181 = sld [smem:[#allocation2 + $0x3]]
    %v182 = vstv %s180
    %vm183 = vcmp.ge.s32.totalorder %v133, %v182
    %vm184 = vcmp.ge.s32.totalorder %v134, %v182
    %vm185 = vcmp.ge.s32.totalorder %v135, %v182
    %vm186 = vcmp.ge.s32.totalorder %v136, %v182
    %vm187 = vcmp.ge.s32.totalorder %v137, %v182
    %vm188 = vcmp.ge.s32.totalorder %v138, %v182
    %vm189 = vcmp.ge.s32.totalorder %v139, %v182
    %vm190 = vcmp.ge.s32.totalorder %v140, %v182
    %vm191 = vcmp.ge.s32.totalorder %v141, %v182
    %vm192 = vcmp.ge.s32.totalorder %v142, %v182
    %v193 = vstv %s181
    %vm194 = vcmp.lt.s32.totalorder %v133, %v193
    %vm195 = vcmp.lt.s32.totalorder %v134, %v193
    %vm196 = vcmp.lt.s32.totalorder %v135, %v193
    %vm197 = vcmp.lt.s32.totalorder %v136, %v193
    %vm198 = vcmp.lt.s32.totalorder %v137, %v193
    %vm199 = vcmp.lt.s32.totalorder %v138, %v193
    %vm200 = vcmp.lt.s32.totalorder %v139, %v193
    %vm201 = vcmp.lt.s32.totalorder %v140, %v193
    %vm202 = vcmp.lt.s32.totalorder %v141, %v193
    %vm203 = vcmp.lt.s32.totalorder %v142, %v193
    %vm204 = vmand %vm183, %vm194
    %vm205 = vmand %vm184, %vm195
    %vm206 = vmand %vm185, %vm196
    %vm207 = vmand %vm186, %vm197
    %vm208 = vmand %vm187, %vm198
    %vm209 = vmand %vm188, %vm199
    %vm210 = vmand %vm189, %vm200
    %vm211 = vmand %vm190, %vm201
    %vm212 = vmand %vm191, %vm202
    %vm213 = vmand %vm192, %vm203
    %vm214 = vmor %vm170, %vm204
    %vm215 = vmor %vm171, %vm205
    %vm216 = vmor %vm172, %vm206
    %vm217 = vmor %vm173, %vm207
    %vm218 = vmor %vm174, %vm208
    %vm219 = vmor %vm175, %vm209
    %vm220 = vmor %vm176, %vm210
    %vm221 = vmor %vm177, %vm211
    %vm222 = vmor %vm178, %vm212
    %vm223 = vmor %vm179, %vm213
    %s224 = sld [smem:[#allocation7]]
    %s225 = sld [smem:[#allocation7 + $0x1]]
    %v226 = vstv %s224
    %vm227 = vcmp.ge.s32.totalorder %v144, %v226
    %vm228 = vcmp.ge.s32.totalorder %v145, %v226
    %v229 = vstv %s225
    %vm230 = vcmp.lt.s32.totalorder %v144, %v229
    %vm231 = vcmp.lt.s32.totalorder %v145, %v229
    %vm232 = vmand %vm227, %vm230
    %vm233 = vmand %vm228, %vm231
    %s234 = sld [smem:[#allocation7 + $0x2]]
    %s235 = sld [smem:[#allocation7 + $0x3]]
    %v236 = vstv %s234
    %vm237 = vcmp.ge.s32.totalorder %v144, %v236
    %vm238 = vcmp.ge.s32.totalorder %v145, %v236
    %v239 = vstv %s235
    %vm240 = vcmp.lt.s32.totalorder %v144, %v239
    %vm241 = vcmp.lt.s32.totalorder %v145, %v239
    %vm242 = vmand %vm237, %vm240
    %vm243 = vmand %vm238, %vm241
    %vm244 = vmor %vm232, %vm242
    %vm245 = vmor %vm233, %vm243
    %v246 = vsel %vm214, 1, 0
    %v247 = vsel %vm215, 1, 0
    %v248 = vsel %vm216, 1, 0
    %v249 = vsel %vm217, 1, 0
    %v250 = vsel %vm218, 1, 0
    %v251 = vsel %vm219, 1, 0
    %v252 = vsel %vm220, 1, 0
    %v253 = vsel %vm221, 1, 0
    %v254 = vsel %vm222, 1, 0
    %v255 = vsel %vm223, 1, 0
    %vm256 = vcmp.eq.s32.totalorder %v246, 1
    %vm257 = vcmp.eq.s32.totalorder %v247, 1
    %vm258 = vcmp.eq.s32.totalorder %v248, 1
    %vm259 = vcmp.eq.s32.totalorder %v249, 1
    %vm260 = vcmp.eq.s32.totalorder %v250, 1
    %vm261 = vcmp.eq.s32.totalorder %v251, 1
    %vm262 = vcmp.eq.s32.totalorder %v252, 1
    %vm263 = vcmp.eq.s32.totalorder %v253, 1
    %vm264 = vcmp.eq.s32.totalorder %v254, 1
    %vm265 = vcmp.eq.s32.totalorder %v255, 1
    %v266 = vsel %vm244, 1, 0
    %v267 = vsel %vm245, 1, 0
    %vm268 = vcmp.eq.s32.totalorder %v266, 1
    %vm269 = vcmp.eq.s32.totalorder %v267, 1
    %vm270 = vmor %vm256, %vm268
    %vm271 = vmor %vm256, %vm269
    %vm272 = vmor %vm257, %vm268
    %vm273 = vmor %vm257, %vm269
    %vm274 = vmor %vm258, %vm268
    %vm275 = vmor %vm258, %vm269
    %vm276 = vmor %vm259, %vm268
    %vm277 = vmor %vm259, %vm269
    %vm278 = vmor %vm260, %vm268
    %vm279 = vmor %vm260, %vm269
    %vm280 = vmor %vm261, %vm268
    %vm281 = vmor %vm261, %vm269
    %vm282 = vmor %vm262, %vm268
    %vm283 = vmor %vm262, %vm269
    %vm284 = vmor %vm263, %vm268
    %vm285 = vmor %vm263, %vm269
    %vm286 = vmor %vm264, %vm268
    %vm287 = vmor %vm264, %vm269
    %vm288 = vmor %vm265, %vm268
    %vm289 = vmor %vm265, %vm269
    %v290 = vsel %vm270, 1, 0
    %v291 = vsel %vm271, 1, 0
    %v292 = vsel %vm272, 1, 0
    %v293 = vsel %vm273, 1, 0
    %v294 = vsel %vm274, 1, 0
    %v295 = vsel %vm275, 1, 0
    %v296 = vsel %vm276, 1, 0
    %v297 = vsel %vm277, 1, 0
    %v298 = vsel %vm278, 1, 0
    %v299 = vsel %vm279, 1, 0
    %v300 = vsel %vm280, 1, 0
    %v301 = vsel %vm281, 1, 0
    %v302 = vsel %vm282, 1, 0
    %v303 = vsel %vm283, 1, 0
    %v304 = vsel %vm284, 1, 0
    %v305 = vsel %vm285, 1, 0
    %v306 = vsel %vm286, 1, 0
    %v307 = vsel %vm287, 1, 0
    %v308 = vsel %vm288, 1, 0
    %v309 = vsel %vm289, 1, 0
    %vm310 = vcmp.eq.s32.totalorder %v290, 1
    %vm311 = vcmp.eq.s32.totalorder %v291, 1
    %vm312 = vcmp.eq.s32.totalorder %v292, 1
    %vm313 = vcmp.eq.s32.totalorder %v293, 1
    %vm314 = vcmp.eq.s32.totalorder %v294, 1
    %vm315 = vcmp.eq.s32.totalorder %v295, 1
    %vm316 = vcmp.eq.s32.totalorder %v296, 1
    %vm317 = vcmp.eq.s32.totalorder %v297, 1
    %vm318 = vcmp.eq.s32.totalorder %v298, 1
    %vm319 = vcmp.eq.s32.totalorder %v299, 1
    %vm320 = vcmp.eq.s32.totalorder %v300, 1
    %vm321 = vcmp.eq.s32.totalorder %v301, 1
    %vm322 = vcmp.eq.s32.totalorder %v302, 1
    %vm323 = vcmp.eq.s32.totalorder %v303, 1
    %vm324 = vcmp.eq.s32.totalorder %v304, 1
    %vm325 = vcmp.eq.s32.totalorder %v305, 1
    %vm326 = vcmp.eq.s32.totalorder %v306, 1
    %vm327 = vcmp.eq.s32.totalorder %v307, 1
    %vm328 = vcmp.eq.s32.totalorder %v308, 1
    %vm329 = vcmp.eq.s32.totalorder %v309, 1
    %v330 = vsel %vm310, 0.0, %v52
    %v331 = vsel %vm311, 0.0, %v53
    %v332 = vsel %vm312, 0.0, %v54
    %v333 = vsel %vm313, 0.0, %v55
    %v334 = vsel %vm314, 0.0, %v56
    %v335 = vsel %vm315, 0.0, %v57
    %v336 = vsel %vm316, 0.0, %v58
    %v337 = vsel %vm317, 0.0, %v59
    %v338 = vsel %vm318, 0.0, %v60
    %v339 = vsel %vm319, 0.0, %v61
    %v340 = vsel %vm320, 0.0, %v62
    %v341 = vsel %vm321, 0.0, %v63
    %v342 = vsel %vm322, 0.0, %v64
    %v343 = vsel %vm323, 0.0, %v65
    %v344 = vsel %vm324, 0.0, %v66
    %v345 = vsel %vm325, 0.0, %v67
    %v346 = vsel %vm326, 0.0, %v68
    %v347 = vsel %vm327, 0.0, %v69
    %v348 = vsel %vm328, 0.0, %v70
    %v349 = vsel %vm329, 0.0, %v71
    %v350 = vsel %vm310, 0.0, %v72
    %v351 = vsel %vm311, 0.0, %v73
    %v352 = vsel %vm312, 0.0, %v74
    %v353 = vsel %vm313, 0.0, %v75
    %v354 = vsel %vm314, 0.0, %v76
    %v355 = vsel %vm315, 0.0, %v77
    %v356 = vsel %vm316, 0.0, %v78
    %v357 = vsel %vm317, 0.0, %v79
    %v358 = vsel %vm318, 0.0, %v80
    %v359 = vsel %vm319, 0.0, %v81
    %v360 = vsel %vm320, 0.0, %v82
    %v361 = vsel %vm321, 0.0, %v83
    %v362 = vsel %vm322, 0.0, %v84
    %v363 = vsel %vm323, 0.0, %v85
    %v364 = vsel %vm324, 0.0, %v86
    %v365 = vsel %vm325, 0.0, %v87
    %v366 = vsel %vm326, 0.0, %v88
    %v367 = vsel %vm327, 0.0, %v89
    %v368 = vsel %vm328, 0.0, %v90
    %v369 = vsel %vm329, 0.0, %v91
    %v370 = vsel %vm310, 0.0, %v92
    %v371 = vsel %vm311, 0.0, %v93
    %v372 = vsel %vm312, 0.0, %v94
    %v373 = vsel %vm313, 0.0, %v95
    %v374 = vsel %vm314, 0.0, %v96
    %v375 = vsel %vm315, 0.0, %v97
    %v376 = vsel %vm316, 0.0, %v98
    %v377 = vsel %vm317, 0.0, %v99
    %v378 = vsel %vm318, 0.0, %v100
    %v379 = vsel %vm319, 0.0, %v101
    %v380 = vsel %vm320, 0.0, %v102
    %v381 = vsel %vm321, 0.0, %v103
    %v382 = vsel %vm322, 0.0, %v104
    %v383 = vsel %vm323, 0.0, %v105
    %v384 = vsel %vm324, 0.0, %v106
    %v385 = vsel %vm325, 0.0, %v107
    %v386 = vsel %vm326, 0.0, %v108
    %v387 = vsel %vm327, 0.0, %v109
    %v388 = vsel %vm328, 0.0, %v110
    %v389 = vsel %vm329, 0.0, %v111
    %v390 = vsel %vm310, 0.0, %v112
    %v391 = vsel %vm311, 0.0, %v113
    %v392 = vsel %vm312, 0.0, %v114
    %v393 = vsel %vm313, 0.0, %v115
    %v394 = vsel %vm314, 0.0, %v116
    %v395 = vsel %vm315, 0.0, %v117
    %v396 = vsel %vm316, 0.0, %v118
    %v397 = vsel %vm317, 0.0, %v119
    %v398 = vsel %vm318, 0.0, %v120
    %v399 = vsel %vm319, 0.0, %v121
    %v400 = vsel %vm320, 0.0, %v122
    %v401 = vsel %vm321, 0.0, %v123
    %v402 = vsel %vm322, 0.0, %v124
    %v403 = vsel %vm323, 0.0, %v125
    %v404 = vsel %vm324, 0.0, %v126
    %v405 = vsel %vm325, 0.0, %v127
    %v406 = vsel %vm326, 0.0, %v128
    %v407 = vsel %vm327, 0.0, %v129
    %v408 = vsel %vm328, 0.0, %v130
    %v409 = vsel %vm329, 0.0, %v131
    %410 = vst [vmem:[#allocation9] sm:$0xff] %v330
    %411 = vst [vmem:[#allocation9 + $0x8] sm:$0xff] %v331
    %412 = vst [vmem:[#allocation9 + $0x10] sm:$0xff] %v332
    %413 = vst [vmem:[#allocation9 + $0x18] sm:$0xff] %v333
    %414 = vst [vmem:[#allocation9 + $0x20] sm:$0xff] %v334
    %415 = vst [vmem:[#allocation9 + $0x28] sm:$0xff] %v335
    %416 = vst [vmem:[#allocation9 + $0x30] sm:$0xff] %v336
    %417 = vst [vmem:[#allocation9 + $0x38] sm:$0xff] %v337
    %418 = vst [vmem:[#allocation9 + $0x40] sm:$0xff] %v338
    %419 = vst [vmem:[#allocation9 + $0x48] sm:$0xff] %v339
    %420 = vst [vmem:[#allocation9 + $0x50] sm:$0xff] %v340
    %421 = vst [vmem:[#allocation9 + $0x58] sm:$0xff] %v341
    %422 = vst [vmem:[#allocation9 + $0x60] sm:$0xff] %v342
    %423 = vst [vmem:[#allocation9 + $0x68] sm:$0xff] %v343
    %424 = vst [vmem:[#allocation9 + $0x70] sm:$0xff] %v344
    %425 = vst [vmem:[#allocation9 + $0x78] sm:$0xff] %v345
    %426 = vst [vmem:[#allocation9 + $0x80] sm:$0xff] %v346
    %427 = vst [vmem:[#allocation9 + $0x88] sm:$0xff] %v347
    %428 = vst [vmem:[#allocation9 + $0x90] sm:$0xff] %v348
    %429 = vst [vmem:[#allocation9 + $0x98] sm:$0xff] %v349
    %430 = vst [vmem:[#allocation9 + $0xa0] sm:$0xff] %v350
    %431 = vst [vmem:[#allocation9 + $0xa8] sm:$0xff] %v351
    %432 = vst [vmem:[#allocation9 + $0xb0] sm:$0xff] %v352
    %433 = vst [vmem:[#allocation9 + $0xb8] sm:$0xff] %v353
    %434 = vst [vmem:[#allocation9 + $0xc0] sm:$0xff] %v354
    %435 = vst [vmem:[#allocation9 + $0xc8] sm:$0xff] %v355
    %436 = vst [vmem:[#allocation9 + $0xd0] sm:$0xff] %v356
    %437 = vst [vmem:[#allocation9 + $0xd8] sm:$0xff] %v357
    %438 = vst [vmem:[#allocation9 + $0xe0] sm:$0xff] %v358
    %439 = vst [vmem:[#allocation9 + $0xe8] sm:$0xff] %v359
    %440 = vst [vmem:[#allocation9 + $0xf0] sm:$0xff] %v360
    %441 = vst [vmem:[#allocation9 + $0xf8] sm:$0xff] %v361
    %442 = vst [vmem:[#allocation9 + $0x100] sm:$0xff] %v362
    %443 = vst [vmem:[#allocation9 + $0x108] sm:$0xff] %v363
    %444 = vst [vmem:[#allocation9 + $0x110] sm:$0xff] %v364
    %445 = vst [vmem:[#allocation9 + $0x118] sm:$0xff] %v365
    %446 = vst [vmem:[#allocation9 + $0x120] sm:$0xff] %v366
    %447 = vst [vmem:[#allocation9 + $0x128] sm:$0xff] %v367
    %448 = vst [vmem:[#allocation9 + $0x130] sm:$0xff] %v368
    %449 = vst [vmem:[#allocation9 + $0x138] sm:$0xff] %v369
    %450 = vst [vmem:[#allocation9 + $0x140] sm:$0xff] %v370
    %451 = vst [vmem:[#allocation9 + $0x148] sm:$0xff] %v371
    %452 = vst [vmem:[#allocation9 + $0x150] sm:$0xff] %v372
    %453 = vst [vmem:[#allocation9 + $0x158] sm:$0xff] %v373
    %454 = vst [vmem:[#allocation9 + $0x160] sm:$0xff] %v374
    %455 = vst [vmem:[#allocation9 + $0x168] sm:$0xff] %v375
    %456 = vst [vmem:[#allocation9 + $0x170] sm:$0xff] %v376
    %457 = vst [vmem:[#allocation9 + $0x178] sm:$0xff] %v377
    %458 = vst [vmem:[#allocation9 + $0x180] sm:$0xff] %v378
    %459 = vst [vmem:[#allocation9 + $0x188] sm:$0xff] %v379
    %460 = vst [vmem:[#allocation9 + $0x190] sm:$0xff] %v380
    %461 = vst [vmem:[#allocation9 + $0x198] sm:$0xff] %v381
    %462 = vst [vmem:[#allocation9 + $0x1a0] sm:$0xff] %v382
    %463 = vst [vmem:[#allocation9 + $0x1a8] sm:$0xff] %v383
    %464 = vst [vmem:[#allocation9 + $0x1b0] sm:$0xff] %v384
    %465 = vst [vmem:[#allocation9 + $0x1b8] sm:$0xff] %v385
    %466 = vst [vmem:[#allocation9 + $0x1c0] sm:$0xff] %v386
    %467 = vst [vmem:[#allocation9 + $0x1c8] sm:$0xff] %v387
    %468 = vst [vmem:[#allocation9 + $0x1d0] sm:$0xff] %v388
    %469 = vst [vmem:[#allocation9 + $0x1d8] sm:$0xff] %v389
    %470 = vst [vmem:[#allocation9 + $0x1e0] sm:$0xff] %v390
    %471 = vst [vmem:[#allocation9 + $0x1e8] sm:$0xff] %v391
    %472 = vst [vmem:[#allocation9 + $0x1f0] sm:$0xff] %v392
    %473 = vst [vmem:[#allocation9 + $0x1f8] sm:$0xff] %v393
    %474 = vst [vmem:[#allocation9 + $0x200] sm:$0xff] %v394
    %475 = vst [vmem:[#allocation9 + $0x208] sm:$0xff] %v395
    %476 = vst [vmem:[#allocation9 + $0x210] sm:$0xff] %v396
    %477 = vst [vmem:[#allocation9 + $0x218] sm:$0xff] %v397
    %478 = vst [vmem:[#allocation9 + $0x220] sm:$0xff] %v398
    %479 = vst [vmem:[#allocation9 + $0x228] sm:$0xff] %v399
    %480 = vst [vmem:[#allocation9 + $0x230] sm:$0xff] %v400
    %481 = vst [vmem:[#allocation9 + $0x238] sm:$0xff] %v401
    %482 = vst [vmem:[#allocation9 + $0x240] sm:$0xff] %v402
    %483 = vst [vmem:[#allocation9 + $0x248] sm:$0xff] %v403
    %484 = vst [vmem:[#allocation9 + $0x250] sm:$0xff] %v404
    %485 = vst [vmem:[#allocation9 + $0x258] sm:$0xff] %v405
    %486 = vst [vmem:[#allocation9 + $0x260] sm:$0xff] %v406
    %487 = vst [vmem:[#allocation9 + $0x268] sm:$0xff] %v407
    %488 = vst [vmem:[#allocation9 + $0x270] sm:$0xff] %v408
    %489 = vst [vmem:[#allocation9 + $0x278] sm:$0xff] %v409
    // Predicated region
    $region26: #{tpu_custom_call.1} parent=1 // pred_check
      _
    $region27: #{tpu_custom_call.1} parent=1 // pred_check_branch
      %491 = sbr.rel (0) target = $region29
    $region28: #{tpu_custom_call.1} parent=1 // pred_region
      %s493 = ssub.s32 10240, 10240
      %494 = vsyncadd [#allocation4], %s493
      %s495 = sshll.u32 [#allocation9], 4
      %s496 = int_to_ptr.vmem [resolvable:$true] %s495
      %501 = dma.vmem_to_hbm [thread:$0]  %s496, 10240, %s3, [#allocation4], 256, 256, 16
    $region29: #{tpu_custom_call.1} parent=1 // pred_fallthru
      _
    // Predicated region
    $region30: #{tpu_custom_call.1} parent=1 // pred_check
      _
    $region31: #{tpu_custom_call.1} parent=1 // pred_check_branch
      %503 = sbr.rel (0) target = $region33
    $region32: #{tpu_custom_call.1} parent=1 // pred_region
      %504 = dma.done [#allocation4], 10240
    $region33: #{tpu_custom_call.1} parent=1 // pred_fallthru
      _
    %505 = vsyncpa [#allocation3], 1
    %506 = vsyncpa [#allocation4], 1
    %507 = vsyncpa [#allocation5], 1
    %508 = vsyncpa [#allocation6], 1

</llo_original>
